<compile_context>
chip_gen: v7x
topology: tpu7x:2x2x1
jax: 0.10.0
libtpu: 0.0.40
codegen_flags: <defaults>
</compile_context>

<pallas_src>
import functools

import jax
import jax.numpy as jnp
from jax.experimental import pallas as pl
from jax.experimental.pallas import tpu as pltpu


def _pca_decode_kernel(z_ref, w_ref, mean_ref, out_ref):
    # z_ref:    (tb, K)  VMEM
    # w_ref:    (K, td)  VMEM   (pre-scaled, lane-dense along D)
    # mean_ref: (1, td)  VMEM
    # out_ref:  (tb, td) VMEM
    y = jnp.dot(z_ref[...], w_ref[...], preferred_element_type=jnp.float32)
    out_ref[...] = (y + mean_ref[...]).astype(out_ref.dtype)


def _choose_tiles(B, D, K, out_itemsize, *, step_budget_bytes,
                  vmem_budget_bytes, td_cap):
    """Pick (tb, td) so each grid step moves ~step_budget_bytes and the
    double-buffered working set stays within vmem_budget_bytes."""
    in_itemsize = 4  # z / w_kd / mean are kept f32 in VMEM

    # --- single-step fast path: whole problem resident (double-buffered) ---
    single_bytes = 2 * (B * D * out_itemsize
                        + (K * D + D + B * K) * in_itemsize)
    if single_bytes <= vmem_budget_bytes:
        return B, D

    # Budget in f32 elements per step, covering out tile + w tile + mean tile.
    budget_elems = max(step_budget_bytes // in_itemsize, 8 * 128)

    # Lane (D) tile: full D if modest, else a 128-multiple cap so the weight
    # tile stays small and stores are full-lane.
    td_cap = max(128, (td_cap // 128) * 128)
    td = D if D <= td_cap else td_cap

    # Sublane (B) tile sized so td * (tb + K + 1) ~= budget_elems.
    rows = budget_elems // td
    tb = max(8, ((rows - K - 1) // 8) * 8)

    if tb >= B:
        tb = B
        # Small batch: inflate the D tile instead so steps stay near budget.
        if td < D:
            td = min(D, max(128, (budget_elems // (B + K + 1) // 128) * 128))
    return tb, td


@functools.partial(jax.jit, static_argnames=("tb", "td", "out_dtype"))
def _pca_decode_call(z, w_kd, mean2d, *, tb, td, out_dtype):
    B, K = z.shape
    _, D = w_kd.shape
    # Grid = (D-tiles, B-tiles): B innermost so w/mean blocks are constant
    # across the inner loop and not re-DMA'd.
    grid = (pl.cdiv(D, td), pl.cdiv(B, tb))
    return pl.pallas_call(
        _pca_decode_kernel,
        out_shape=jax.ShapeDtypeStruct((B, D), out_dtype),
        grid_spec=pltpu.PrefetchScalarGridSpec(
            num_scalar_prefetch=0,
            grid=grid,
            in_specs=[
                pl.BlockSpec((tb, K), lambda dj, bi: (bi, 0)),
                pl.BlockSpec((K, td), lambda dj, bi: (0, dj)),
                pl.BlockSpec((1, td), lambda dj, bi: (0, dj)),
            ],
            out_specs=pl.BlockSpec((tb, td), lambda dj, bi: (bi, dj)),
        ),
        compiler_params=pltpu.CompilerParams(
            dimension_semantics=("parallel", "parallel"),
            vmem_limit_bytes=32 * 1024 * 1024,
        ),
    )(z, w_kd, mean2d)


def make_pca_decoder(evecs, scale, mean, *, out_dtype=None,
                     step_budget_bytes=4 << 20,
                     vmem_budget_bytes=16 << 20,
                     td_cap=4096):
    """Build a decode(z) function for fixed PCA buffers.

    The scale is folded into the eigenvectors and the result is transposed to
    a lane-dense (K, D) weight exactly once here (host/XLA side, not per
    call).  Call the returned decode() repeatedly; it dispatches a jitted
    pallas_call keyed only on static tile sizes.
    """
    D, K = evecs.shape
    assert scale.shape == (K,)
    assert mean.shape == (D,)
    # One-time fold + transpose:  z @ w_kd == (z * scale) @ evecs.T
    w_kd = (jnp.asarray(evecs) * jnp.asarray(scale)[None, :]).T.astype(jnp.float32)
    mean2d = jnp.asarray(mean).reshape(1, D).astype(jnp.float32)

    def decode(z):
        B, Kz = z.shape
        assert Kz == K
        odt = jnp.dtype(out_dtype) if out_dtype is not None else jnp.dtype(z.dtype)
        tb, td = _choose_tiles(
            B, D, K, odt.itemsize,
            step_budget_bytes=step_budget_bytes,
            vmem_budget_bytes=vmem_budget_bytes,
            td_cap=td_cap,
        )
        return _pca_decode_call(z, w_kd, mean2d, tb=tb, td=td, out_dtype=odt)

    return decode


def pca_decode(z, scale, evecs, mean, **kwargs):
    """Convenience one-shot wrapper matching PCA.forward semantics.

    NOTE: this refolds (evecs * scale).T on every call.  For repeated decodes
    build the decoder once with make_pca_decoder(...) and reuse it.
    """
    return make_pca_decoder(evecs, scale, mean, **kwargs)(z)


if __name__ == "__main__":
    key = jax.random.PRNGKey(0)
    k1, k2, k3, k4, k5 = jax.random.split(key, 5)

    # --- test 1: module-consistent small shapes, single-step fast path ------
    B, K, D = 8, 8, 128
    z = jax.random.normal(k1, (B, K), dtype=jnp.float32)
    evecs = jnp.linalg.qr(jax.random.normal(k2, (D, K), dtype=jnp.float32))[0]
    mean = jax.random.normal(k3, (D,), dtype=jnp.float32)
    scale = 0.5 + jax.random.uniform(k4, (K,), dtype=jnp.float32)

    out = jax.block_until_ready(pca_decode(z, scale, evecs, mean))
    ref = (z * scale) @ evecs.T + mean
    assert out.shape == (B, D)
    assert jnp.allclose(out, ref, atol=1e-5, rtol=1e-5)

    # --- test 2: forced multi-tile grid on both axes (partial edge tiles) ---
    B2, K2, D2 = 48, 16, 640
    z2 = jax.random.normal(k5, (B2, K2), dtype=jnp.float32)
    evecs2 = jnp.linalg.qr(jax.random.normal(k2, (D2, K2), dtype=jnp.float32))[0]
    mean2 = jax.random.normal(k3, (D2,), dtype=jnp.float32)
    scale2 = 0.5 + jax.random.uniform(k4, (K2,), dtype=jnp.float32)

    decode2 = make_pca_decoder(
        evecs2, scale2, mean2,
        step_budget_bytes=64 * 1024,   # tiny budget -> multiple B and D tiles
        vmem_budget_bytes=4 * 1024,    # disable the single-step fast path
        td_cap=256,
    )
    out2 = jax.block_until_ready(decode2(z2))
    ref2 = (z2 * scale2) @ evecs2.T + mean2
    assert out2.shape == (B2, D2)
    assert jnp.allclose(out2, ref2, atol=1e-5, rtol=1e-5)

    # --- test 3: narrow (bf16) output path, f32 accumulate/epilogue ---------
    B3, K3, D3 = 16, 8, 256
    z3 = jax.random.normal(k1, (B3, K3), dtype=jnp.float32)
    evecs3 = jnp.linalg.qr(jax.random.normal(k2, (D3, K3), dtype=jnp.float32))[0]
    mean3 = jax.random.normal(k3, (D3,), dtype=jnp.float32)
    scale3 = 0.5 + jax.random.uniform(k4, (K3,), dtype=jnp.float32)

    decode3 = make_pca_decoder(evecs3, scale3, mean3, out_dtype=jnp.bfloat16)
    out3 = jax.block_until_ready(decode3(z3))
    ref3 = ((z3 * scale3) @ evecs3.T + mean3).astype(jnp.bfloat16)
    assert out3.shape == (B3, D3) and out3.dtype == jnp.bfloat16
    assert jnp.allclose(out3.astype(jnp.float32), ref3.astype(jnp.float32),
                        atol=3e-2, rtol=3e-2)

    print("KERNEL_OK")
</pallas_src>

<mosaic_0001>
module attributes {stable_mosaic.version = 11 : i64} {
  func.func @_pca_decode_kernel(%arg0: i32, %arg1: i32, %arg2: memref<8x8xf32, #tpu.memory_space<vmem>>, %arg3: memref<8x128xf32, #tpu.memory_space<vmem>>, %arg4: memref<1x128xf32, #tpu.memory_space<vmem>>, %arg5: memref<8x128xf32, #tpu.memory_space<vmem>>) attributes {dimension_semantics = [#tpu.dimension_semantics<parallel>, #tpu.dimension_semantics<parallel>], iteration_bounds = array<i64: 1, 1>, scalar_prefetch = 0 : i64, scratch_operands = 0 : i64, tpu.core_type = #tpu.core_type<tc>, window_params = [{transform_indices = @transform_0, window_bounds = array<i64: 8, 8>}, {transform_indices = @transform_1, window_bounds = array<i64: 8, 128>}, {transform_indices = @transform_2, window_bounds = array<i64: 1, 128>}, {transform_indices = @transform_3, window_bounds = array<i64: 8, 128>}]} {
    %c0 = arith.constant 0 : index
    %c0_0 = arith.constant 0 : index
    %0 = vector.load %arg2[%c0, %c0_0] : memref<8x8xf32, #tpu.memory_space<vmem>>, vector<8x8xf32>
    %c0_1 = arith.constant 0 : index
    %c0_2 = arith.constant 0 : index
    %1 = vector.load %arg3[%c0_1, %c0_2] : memref<8x128xf32, #tpu.memory_space<vmem>>, vector<8x128xf32>
    %cst = arith.constant dense<0.000000e+00> : vector<8x128xf32>
    %2 = tpu.matmul %0, %1, %cst {dimension_numbers = #tpu.dot_dimension_numbers<[1], [0], [0], [1], [0, 0, 1, 1], [], []>} : vector<8x8xf32>, vector<8x128xf32>, vector<8x128xf32> -> vector<8x128xf32>
    %c0_3 = arith.constant 0 : index
    %c0_4 = arith.constant 0 : index
    %3 = vector.load %arg4[%c0_3, %c0_4] : memref<1x128xf32, #tpu.memory_space<vmem>>, vector<1x128xf32>
    %4 = vector.broadcast %3 : vector<1x128xf32> to vector<8x128xf32>
    %5 = arith.addf %2, %4 : vector<8x128xf32>
    %c0_5 = arith.constant 0 : index
    %c0_6 = arith.constant 0 : index
    %6 = vector.load %arg5[%c0_5, %c0_6] : memref<8x128xf32, #tpu.memory_space<vmem>>, vector<8x128xf32>
    tpu.vector_store %arg5[%c0_5, %c0_6], %5 {strides = array<i32>} : memref<8x128xf32, #tpu.memory_space<vmem>>, vector<8x128xf32>,
    return
  }
  func.func @transform_0(%arg0: i32, %arg1: i32) -> (i32, i32) {
    %c0_i32 = arith.constant 0 : i32
    %c0_i32_0 = arith.constant 0 : i32
    return %arg1, %c0_i32 : i32, i32
  }
  func.func @transform_1(%arg0: i32, %arg1: i32) -> (i32, i32) {
    %c0_i32 = arith.constant 0 : i32
    %c0_i32_0 = arith.constant 0 : i32
    return %c0_i32, %arg0 : i32, i32
  }
  func.func @transform_2(%arg0: i32, %arg1: i32) -> (i32, i32) {
    %c0_i32 = arith.constant 0 : i32
    %c0_i32_0 = arith.constant 0 : i32
    return %c0_i32, %arg0 : i32, i32
  }
  func.func @transform_3(%arg0: i32, %arg1: i32) -> (i32, i32) {
    %c0_i32 = arith.constant 0 : i32
    return %arg1, %arg0 : i32, i32
  }
}

</mosaic_0001>

<llo_original>
// kernel: _pca_decode_call.1
$region0: #{_pca_decode_call.1}
  #allocation0 [shape = 'u32[]', space=smem, size = 0x4, offset = 0x4, fixed_abs, tag = 'smem constant byte address 0x4 - core index']
  #allocation1 [shape = 'u32[144,128]{1,0:T(1,128)}', space=vmem, size = 0x12000, scoped, tag = 'internal scratch']
  %s0 = inlined_call_operand.hbm [shape: f32[8,8], index: 0, kind: input, shape index: {}]
  %s1 = inlined_call_operand.hbm [shape: f32[8,128], index: 1, kind: input, shape index: {}]
  %s2 = inlined_call_operand.vmem [shape: f32[1,128], index: 2, kind: input, shape index: {}]
  %s3 = inlined_call_operand.hbm [shape: f32[8,128], index: 3, kind: output, shape index: {}]
  %s4 = sld [smem:[#allocation0]]
  $region30: #{_pca_decode_call.1} parent=0
    _
  %s6 = ssub.s32 1, %s4
  %s7 = scalar_select 0, %s6, %s4
  $region1: #{_pca_decode_call.1} parent=0
    #allocation2 [shape = 'u8[4096]{0}', space=vmem, size = 0x1000, scoped, tag = 'input window, operand 0, single buffered']
    #allocation3 [shape = 's32[1]{0}', space=sflag, size = 0x4, scoped, tag = 'scoped memory for _pca_decode_call.1']
    #allocation4 [shape = 's32[1]{0}', space=sflag, size = 0x4, scoped, tag = 'scoped memory for _pca_decode_call.1']
    #allocation5 [shape = 'u8[4096]{0}', space=vmem, size = 0x1000, scoped, tag = 'input window, operand 1, single buffered']
    #allocation6 [shape = 's32[1]{0}', space=sflag, size = 0x4, scoped, tag = 'scoped memory for _pca_decode_call.1']
    #allocation7 [shape = 'u8[4096]{0}', space=vmem, size = 0x1000, scoped, tag = 'output window, operand 0, single buffered']
    %8 = vsyncpa [#allocation3], 0
    %9 = vsyncpa [#allocation6], 0
    %10 = vsyncpa [#allocation4], 0
    // Predicated region
    $region2: #{_pca_decode_call.1} parent=1 // pred_check
      _
    $region3: #{_pca_decode_call.1} parent=1 // pred_check_branch
      %12 = sbr.rel (0) target = $region5
    $region4: #{_pca_decode_call.1} parent=1 // pred_region
      %s14 = ssub.s32 128, 128
      %15 = vsyncadd [#allocation3], %s14
      %s17 = sshll.u32 [#allocation2], 4
      %s18 = int_to_ptr.vmem [resolvable:$true] %s17
      %20 = dma.hbm_to_vmem [thread:$0]  %s0, 128, %s18, [#allocation3]
    $region5: #{_pca_decode_call.1} parent=1 // pred_fallthru
      _
    // Predicated region
    $region6: #{_pca_decode_call.1} parent=1 // pred_check
      _
    $region7: #{_pca_decode_call.1} parent=1 // pred_check_branch
      %22 = sbr.rel (0) target = $region9
    $region8: #{_pca_decode_call.1} parent=1 // pred_region
      %s24 = ssub.s32 128, 128
      %25 = vsyncadd [#allocation6], %s24
      %s27 = sshll.u32 [#allocation5], 4
      %s28 = int_to_ptr.vmem [resolvable:$true] %s27
      %30 = dma.hbm_to_vmem [thread:$0]  %s1, 128, %s28, [#allocation6]
    $region9: #{_pca_decode_call.1} parent=1 // pred_fallthru
      _
    // Predicated region
    $region10: #{_pca_decode_call.1} parent=1 // pred_check
      _
    $region11: #{_pca_decode_call.1} parent=1 // pred_check_branch
      %32 = sbr.rel (0) target = $region13
    $region12: #{_pca_decode_call.1} parent=1 // pred_region
      _
    $region13: #{_pca_decode_call.1} parent=1 // pred_fallthru
      _
    // Predicated region
    $region14: #{_pca_decode_call.1} parent=1 // pred_check
      _
    $region15: #{_pca_decode_call.1} parent=1 // pred_check_branch
      %34 = sbr.rel (0) target = $region17
    $region16: #{_pca_decode_call.1} parent=1 // pred_region
      %35 = dma.done [#allocation3], 128
    $region17: #{_pca_decode_call.1} parent=1 // pred_fallthru
      _
    // Predicated region
    $region18: #{_pca_decode_call.1} parent=1 // pred_check
      _
    $region19: #{_pca_decode_call.1} parent=1 // pred_check_branch
      %37 = sbr.rel (0) target = $region21
    $region20: #{_pca_decode_call.1} parent=1 // pred_region
      %38 = dma.done [#allocation6], 128
    $region21: #{_pca_decode_call.1} parent=1 // pred_fallthru
      _
    %v39 = vld [vmem:[#allocation2] sm:$0xff]
    %v40 = vld [vmem:[#allocation5] sm:$0xff]
    %v41 = vld [vmem:[%s2] sm:$0x1]
    %v43 = vlaneseq
    %v44 = vshrl.u32 %v43, 7
    %v45 = vsub.s32 0, %v44
    %v46 = vrot.slane %v41, %v45
    %vm48 = vcmask 64512
    %v50 = vsel %vm48, %v39, 0
    %52 = vmatprep.subr.mxu0 0.0
    %53 = vmatpush1.msra.mxu0 %v40
    %54 = vmatprep.subr.mxu0 0.0
    %55 = vmatpush1.msra.mxu0 0.0
    %56 = vmatprep.subr.mxu0 0.0
    %57 = vmatpush1.msra.mxu0 0.0
    %58 = vmatprep.subr.mxu0 0.0
    %59 = vmatpush1.msra.mxu0 0.0
    %60 = vmatprep.subr.mxu0 0.0
    %61 = vmatpush1.msra.mxu0 0.0
    %62 = vmatprep.subr.mxu0 0.0
    %63 = vmatpush1.msra.mxu0 0.0
    %64 = vmatprep.subr.mxu0 0.0
    %65 = vmatpush1.msra.mxu0 0.0
    %66 = vmatprep.subr.mxu0 0.0
    %67 = vmatpush1.msra.mxu0 0.0
    %68 = vmatprep.subr.mxu0 0.0
    %69 = vmatpush1.msra.mxu0 0.0
    %70 = vmatprep.subr.mxu0 0.0
    %71 = vmatpush1.msra.mxu0 0.0
    %72 = vmatprep.subr.mxu0 0.0
    %73 = vmatpush1.msra.mxu0 0.0
    %74 = vmatprep.subr.mxu0 0.0
    %75 = vmatpush1.msra.mxu0 0.0
    %76 = vmatprep.subr.mxu0 0.0
    %77 = vmatpush1.msra.mxu0 0.0
    %78 = vmatprep.subr.mxu0 0.0
    %79 = vmatpush1.msra.mxu0 0.0
    %80 = vmatprep.subr.mxu0 0.0
    %81 = vmatpush1.msra.mxu0 0.0
    %82 = vmatprep.subr.mxu0 0.0
    %83 = vmatpush1.msra.mxu0 0.0
    %84 = vmatprep.subr.mxu0 0.0
    %85 = vmatpush1.msra.mxu0 0.0
    %86 = vmatprep.subr.mxu0 0.0
    %87 = vmatpush1.msra.mxu0 0.0
    %88 = vmatprep.subr.mxu0 0.0
    %89 = vmatpush1.msra.mxu0 0.0
    %90 = vmatprep.subr.mxu0 0.0
    %91 = vmatpush1.msra.mxu0 0.0
    %92 = vmatprep.subr.mxu0 0.0
    %93 = vmatpush1.msra.mxu0 0.0
    %94 = vmatprep.subr.mxu0 0.0
    %95 = vmatpush1.msra.mxu0 0.0
    %96 = vmatprep.subr.mxu0 0.0
    %97 = vmatpush1.msra.mxu0 0.0
    %98 = vmatprep.subr.mxu0 0.0
    %99 = vmatpush1.msra.mxu0 0.0
    %100 = vmatprep.subr.mxu0 0.0
    %101 = vmatpush1.msra.mxu0 0.0
    %102 = vmatprep.subr.mxu0 0.0
    %103 = vmatpush1.msra.mxu0 0.0
    %104 = vmatprep.subr.mxu0 0.0
    %105 = vmatpush1.msra.mxu0 0.0
    %106 = vmatprep.subr.mxu0 0.0
    %107 = vmatpush1.msra.mxu0 0.0
    %108 = vmatprep.subr.mxu0 0.0
    %109 = vmatpush1.msra.mxu0 0.0
    %110 = vmatprep.subr.mxu0 0.0
    %111 = vmatpush1.msra.mxu0 0.0
    %112 = vmatprep.subr.mxu0 0.0
    %113 = vmatpush1.msra.mxu0 0.0
    %114 = vmatprep.subr.mxu0 0.0
    %115 = vmatpush1.msra.mxu0 0.0
    %116 = vmatprep.mubr.f32.mxu0 0.0
    %117 = vmatmul.mubr.f32.gmra.mrb[0].mxu0 %v50
    %v118 = vpop.f32.mrb[0].mxu0
    %v119 = vadd.f32 %v46, %v118
    %v120 = vpop.f32.mrb[0].mxu0
    %121 = vdwg.mxu0
    %122 = vst [vmem:[#allocation7] sm:$0xff] %v119
    // Predicated region
    $region22: #{_pca_decode_call.1} parent=1 // pred_check
      _
    $region23: #{_pca_decode_call.1} parent=1 // pred_check_branch
      %124 = sbr.rel (0) target = $region25
    $region24: #{_pca_decode_call.1} parent=1 // pred_region
      %s126 = ssub.s32 128, 128
      %127 = vsyncadd [#allocation4], %s126
      %s129 = sshll.u32 [#allocation7], 4
      %s130 = int_to_ptr.vmem [resolvable:$true] %s129
      %132 = dma.vmem_to_hbm [thread:$0]  %s130, 128, %s3, [#allocation4]
    $region25: #{_pca_decode_call.1} parent=1 // pred_fallthru
      _
    // Predicated region
    $region26: #{_pca_decode_call.1} parent=1 // pred_check
      _
    $region27: #{_pca_decode_call.1} parent=1 // pred_check_branch
      %134 = sbr.rel (0) target = $region29
    $region28: #{_pca_decode_call.1} parent=1 // pred_region
      %135 = dma.done [#allocation4], 128
    $region29: #{_pca_decode_call.1} parent=1 // pred_fallthru
      _
    %136 = vsyncpa [#allocation3], 1
    %137 = vsyncpa [#allocation6], 1
    %138 = vsyncpa [#allocation4], 1

</llo_original>
